<compile_context>
chip_gen: v7x
topology: tpu7x:2x2x1
jax: 0.10.0
libtpu: 0.0.40
codegen_flags: <defaults>
</compile_context>

<pallas_src>
import jax
import jax.numpy as jnp
from jax.experimental import pallas as pl
from jax.experimental.pallas import tpu as pltpu

_LANES = 128               # TPU vreg lane width; lane-dense last dim => unmasked vst.
_TILE_ROWS = 512           # row-tile for the pipelined large-input path.
_GRIDLESS_ROW_LIMIT = 2048 # <= 2048 x 128 f32 = 1 MiB: gridless full-block copy.


def _identity_kernel(x_ref, o_ref):
    # Elementwise pass-through of the current VMEM-resident block.
    o_ref[...] = x_ref[...]


def _copy_slab(x2d: jax.Array) -> jax.Array:
    """Identity-copy a lane-dense (rows, 128) slab through VMEM."""
    rows, lanes = x2d.shape

    if rows <= _GRIDLESS_ROW_LIMIT:
        # Small input: whole slab resident in VMEM, single unpipelined copy.
        return pl.pallas_call(
            _identity_kernel,
            out_shape=jax.ShapeDtypeStruct(x2d.shape, x2d.dtype),
            in_specs=[pl.BlockSpec(memory_space=pltpu.MemorySpace.VMEM)],
            out_specs=pl.BlockSpec(memory_space=pltpu.MemorySpace.VMEM),
        )(x2d)

    # Large input: pipelined (512, 128) row tiles.  Per-step footprint:
    # 256 KiB/block x 2 buffers x 2 arrays = 1 MiB -> fits the 16 MiB (v5e) /
    # 32 MiB (v6e/v7x) default scoped-VMEM limits and v7x's 64 MiB physical VMEM
    # with large headroom.  "parallel" lets v7x shard rows across both TCs.
    grid = (pl.cdiv(rows, _TILE_ROWS),)
    return pl.pallas_call(
        _identity_kernel,
        out_shape=jax.ShapeDtypeStruct(x2d.shape, x2d.dtype),
        grid=grid,
        in_specs=[pl.BlockSpec((_TILE_ROWS, lanes), lambda i: (i, 0))],
        out_specs=pl.BlockSpec((_TILE_ROWS, lanes), lambda i: (i, 0)),
        compiler_params=pltpu.CompilerParams(
            dimension_semantics=("parallel",)),
    )(x2d)


@jax.jit
def agent_forward(x: jax.Array) -> jax.Array:
    """Identity forward (the Agent base class has no parameters / compute).

    x: NCHW float32 array, e.g. (2, 4, 16, 16).
    Returns an array with identical shape/dtype/values.
    """
    orig_shape = x.shape
    total = x.size

    if total % _LANES == 0:
        # Lane-dense 2-D slab: last dim fills all 128 lanes -> full unmasked
        # vector stores.
        x2d = x.reshape(total // _LANES, _LANES)
        return _copy_slab(x2d).reshape(orig_shape)

    # Awkward sizes: pad the flattened view up to a 128-lane multiple so the
    # kernel still issues full-width stores, then slice the pad back off.
    flat = x.reshape(total)
    pad = (-total) % _LANES
    padded = jnp.pad(flat, (0, pad))
    out = _copy_slab(padded.reshape(-1, _LANES)).reshape(-1)[:total]
    return out.reshape(orig_shape)


if __name__ == "__main__":
    key = jax.random.PRNGKey(0)
    # Small NCHW input consistent with a typical Agent observation tensor.
    x = jax.random.normal(key, (2, 4, 16, 16), dtype=jnp.float32)

    y = agent_forward(x)
    jax.block_until_ready(y)

    # Identity semantics check.
    assert y.shape == x.shape and y.dtype == x.dtype
    assert bool(jnp.allclose(y, x)), "identity pass-through mismatch"

    print("KERNEL_OK")
</pallas_src>

<mosaic_0001>
module attributes {stable_mosaic.version = 11 : i64} {
  func.func @_identity_kernel(%arg0: memref<16x128xf32, #tpu.memory_space<vmem>>, %arg1: memref<16x128xf32, #tpu.memory_space<vmem>>) attributes {dimension_semantics = [], scalar_prefetch = 0 : i64, scratch_operands = 0 : i64, tpu.core_type = #tpu.core_type<tc>} {
    %c0 = arith.constant 0 : index
    %c0_0 = arith.constant 0 : index
    %0 = vector.load %arg0[%c0, %c0_0] : memref<16x128xf32, #tpu.memory_space<vmem>>, vector<16x128xf32>
    %c0_1 = arith.constant 0 : index
    %c0_2 = arith.constant 0 : index
    %1 = vector.load %arg1[%c0_1, %c0_2] : memref<16x128xf32, #tpu.memory_space<vmem>>, vector<16x128xf32>
    tpu.vector_store %arg1[%c0_1, %c0_2], %0 {strides = array<i32>} : memref<16x128xf32, #tpu.memory_space<vmem>>, vector<16x128xf32>,
    return
  }
}

</mosaic_0001>

<llo_original>
// kernel: agent_forward.1
$region0: #{agent_forward.1}
  #allocation0 [shape = 'u32[]', space=smem, size = 0x4, offset = 0x4, fixed_abs, tag = 'smem constant byte address 0x4 - core index']
  #allocation1 [shape = 'u32[144,128]{1,0:T(1,128)}', space=vmem, size = 0x12000, scoped, tag = 'internal scratch']
  %s0 = inlined_call_operand.vmem [shape: f32[16,128], index: 0, kind: input, shape index: {}]
  %s1 = inlined_call_operand.vmem [shape: f32[16,128], index: 1, kind: output, shape index: {}]
  %s2 = sld [smem:[#allocation0]]
  $region14: #{agent_forward.1} parent=0
    _
  %s4 = ssub.s32 1, %s2
  %s5 = scalar_select 0, %s4, %s2
  // Predicated region
  $region2: #{agent_forward.1} parent=0 // pred_check
    _
  $region3: #{agent_forward.1} parent=0 // pred_check_branch
    %7 = sbr.rel (0) target = $region5
  $region4: #{agent_forward.1} parent=0 // pred_region
    _
  $region5: #{agent_forward.1} parent=0 // pred_fallthru
    _
  %v8 = vld [vmem:[%s0] sm:$0xff]
  %v9 = vld [vmem:[%s0 + $0x8] sm:$0xff]
  %10 = vst [vmem:[%s1] sm:$0xff] %v8
  %11 = vst [vmem:[%s1 + $0x8] sm:$0xff] %v9
  // Predicated region
  $region6: #{agent_forward.1} parent=0 // pred_check
    _
  $region7: #{agent_forward.1} parent=0 // pred_check_branch
    %13 = sbr.rel (0) target = $region9
  $region8: #{agent_forward.1} parent=0 // pred_region
    _
  $region9: #{agent_forward.1} parent=0 // pred_fallthru
    _
  // Predicated region
  $region10: #{agent_forward.1} parent=0 // pred_check
    _
  $region11: #{agent_forward.1} parent=0 // pred_check_branch
    %15 = sbr.rel (0) target = $region13
  $region12: #{agent_forward.1} parent=0 // pred_region
    _
  $region13: #{agent_forward.1} parent=0 // pred_fallthru
    _

</llo_original>
